<compile_context>
chip_gen: v7x
topology: tpu7x:2x2x1
jax: 0.10.0
libtpu: 0.0.40
codegen_flags: <defaults>
</compile_context>

<pallas_src>
import jax
import jax.numpy as jnp
from jax.experimental import pallas as pl
from jax.experimental.pallas import tpu as pltpu

IN_DIM = 28 * 28   # 784
H1 = 128
H2 = 64
OUT_DIM = 10


def mlp_kernel(x_ref, w1_ref, b1_ref, w2_ref, b2_ref, w3_ref, b3_ref, o_ref):
    # x_ref : (TILE_B, 784)  — one batch tile (pipelined over the grid), f32 or bf16
    # w*_ref: full weight matrices, resident in VMEM (constant index_map -> no re-DMA)
    # b*_ref: (1, D) f32 biases
    # o_ref : (TILE_B, 10) f32 logits
    x = x_ref[...]  # no upcast: MXU consumes native dtype, accumulates in f32

    h1 = jnp.dot(x, w1_ref[...], preferred_element_type=jnp.float32) + b1_ref[...]
    h1 = jnp.maximum(h1, 0.0)

    h2 = jnp.dot(h1.astype(w2_ref.dtype), w2_ref[...],
                 preferred_element_type=jnp.float32) + b2_ref[...]
    h2 = jnp.maximum(h2, 0.0)

    out = jnp.dot(h2.astype(w3_ref.dtype), w3_ref[...],
                  preferred_element_type=jnp.float32) + b3_ref[...]
    o_ref[...] = out.astype(o_ref.dtype)


def _round_up(n, m):
    return ((n + m - 1) // m) * m


def custom_nn_forward(x, w1, b1, w2, b2, w3, b3, *, tile_b=512):
    """x: (..., 784) or (..., 1, 28, 28); returns (B, 10) f32 logits.

    Activations/weights may be f32 or bf16; accumulation is always f32.
    """
    x = x.reshape(-1, IN_DIM)
    B = x.shape[0]

    # Batch tile: multiple of 16 (covers bf16 sublane packing), capped at tile_b.
    # Blocks larger than the array / ragged last blocks are handled by Pallas masking,
    # so no HBM-materializing pad of x is needed.
    tb = min(tile_b, _round_up(B, 16))
    n_tiles = pl.cdiv(B, tb)

    # Biases as (1, D) f32 arrays (f32 elementwise path regardless of matmul dtype).
    b1_2d = b1.reshape(1, H1).astype(jnp.float32)
    b2_2d = b2.reshape(1, H2).astype(jnp.float32)
    b3_2d = b3.reshape(1, OUT_DIM).astype(jnp.float32)

    out = pl.pallas_call(
        mlp_kernel,
        out_shape=jax.ShapeDtypeStruct((B, OUT_DIM), jnp.float32),
        grid_spec=pltpu.PrefetchScalarGridSpec(
            num_scalar_prefetch=0,
            grid=(n_tiles,),
            in_specs=[
                pl.BlockSpec((tb, IN_DIM), lambda i: (i, 0)),     # activations: tiled over batch
                pl.BlockSpec((IN_DIM, H1), lambda i: (0, 0)),     # weights: constant block (resident)
                pl.BlockSpec((1, H1), lambda i: (0, 0)),
                pl.BlockSpec((H1, H2), lambda i: (0, 0)),
                pl.BlockSpec((1, H2), lambda i: (0, 0)),
                pl.BlockSpec((H2, OUT_DIM), lambda i: (0, 0)),
                pl.BlockSpec((1, OUT_DIM), lambda i: (0, 0)),
            ],
            out_specs=pl.BlockSpec((tb, OUT_DIM), lambda i: (i, 0)),
        ),
        compiler_params=pltpu.CompilerParams(
            dimension_semantics=("parallel",),  # independent batch tiles -> megacore on v7x
        ),
    )(x, w1, b1_2d, w2, b2_2d, w3, b3_2d)

    return out


def custom_nn_ref(x, w1, b1, w2, b2, w3, b3):
    x = x.reshape(-1, IN_DIM).astype(jnp.float32)
    w1, b1 = w1.astype(jnp.float32), b1.astype(jnp.float32)
    w2, b2 = w2.astype(jnp.float32), b2.astype(jnp.float32)
    w3, b3 = w3.astype(jnp.float32), b3.astype(jnp.float32)
    h1 = jax.nn.relu(x @ w1 + b1)
    h2 = jax.nn.relu(h1 @ w2 + b2)
    return h2 @ w3 + b3


def init_params(key):
    """PyTorch nn.Linear default init: U(-1/sqrt(fan_in), 1/sqrt(fan_in))."""
    ks = jax.random.split(key, 6)

    def lin(kw, kb, fan_in, fan_out):
        bound = 1.0 / jnp.sqrt(jnp.float32(fan_in))
        w = jax.random.uniform(kw, (fan_in, fan_out), jnp.float32, -bound, bound)
        b = jax.random.uniform(kb, (fan_out,), jnp.float32, -bound, bound)
        return w, b

    w1, b1 = lin(ks[0], ks[1], IN_DIM, H1)
    w2, b2 = lin(ks[2], ks[3], H1, H2)
    w3, b3 = lin(ks[4], ks[5], H2, OUT_DIM)
    return w1, b1, w2, b2, w3, b3


if __name__ == "__main__":
    key = jax.random.PRNGKey(0)
    k_params, k_x1, k_x2 = jax.random.split(key, 3)

    w1, b1, w2, b2, w3, b3 = init_params(k_params)

    # --- f32 path: exact module semantics, small MNIST-like batch (4, 1, 28, 28) ---
    x = jax.random.normal(k_x1, (4, 1, 28, 28), dtype=jnp.float32)
    logits = custom_nn_forward(x, w1, b1, w2, b2, w3, b3)
    jax.block_until_ready(logits)

    ref = custom_nn_ref(x, w1, b1, w2, b2, w3, b3)
    assert logits.shape == (4, OUT_DIM), logits.shape
    assert jnp.allclose(logits, ref, atol=1e-4, rtol=1e-4), (
        jnp.max(jnp.abs(logits - ref)))

    # --- bf16 activation/weight path (HBM-traffic win), ragged batch (40 not % 16) ---
    x2 = jax.random.normal(k_x2, (40, IN_DIM), dtype=jnp.float32)
    logits_bf16 = custom_nn_forward(
        x2.astype(jnp.bfloat16),
        w1.astype(jnp.bfloat16), b1,
        w2.astype(jnp.bfloat16), b2,
        w3.astype(jnp.bfloat16), b3,
    )
    jax.block_until_ready(logits_bf16)

    ref2 = custom_nn_ref(x2, w1, b1, w2, b2, w3, b3)
    assert logits_bf16.shape == (40, OUT_DIM), logits_bf16.shape
    assert jnp.allclose(logits_bf16, ref2, atol=5e-2, rtol=5e-2), (
        jnp.max(jnp.abs(logits_bf16 - ref2)))

    print("KERNEL_OK")
</pallas_src>

<mosaic_0001>
module attributes {stable_mosaic.version = 11 : i64} {
  func.func @mlp_kernel(%arg0: i32, %arg1: memref<16x784xf32, #tpu.memory_space<vmem>>, %arg2: memref<784x128xf32, #tpu.memory_space<vmem>>, %arg3: memref<1x128xf32, #tpu.memory_space<vmem>>, %arg4: memref<128x64xf32, #tpu.memory_space<vmem>>, %arg5: memref<1x64xf32, #tpu.memory_space<vmem>>, %arg6: memref<64x10xf32, #tpu.memory_space<vmem>>, %arg7: memref<1x10xf32, #tpu.memory_space<vmem>>, %arg8: memref<16x10xf32, #tpu.memory_space<vmem>>) attributes {dimension_semantics = [#tpu.dimension_semantics<parallel>], iteration_bounds = array<i64: 1>, scalar_prefetch = 0 : i64, scratch_operands = 0 : i64, tpu.core_type = #tpu.core_type<tc>, window_params = [{transform_indices = @transform_0, window_bounds = array<i64: 16, 784>}, {pipeline_mode = #tpu.pipeline_mode<synchronous>, transform_indices = @transform_1, window_bounds = array<i64: 784, 128>}, {pipeline_mode = #tpu.pipeline_mode<synchronous>, transform_indices = @transform_2, window_bounds = array<i64: 1, 128>}, {pipeline_mode = #tpu.pipeline_mode<synchronous>, transform_indices = @transform_3, window_bounds = array<i64: 128, 64>}, {pipeline_mode = #tpu.pipeline_mode<synchronous>, transform_indices = @transform_4, window_bounds = array<i64: 1, 64>}, {pipeline_mode = #tpu.pipeline_mode<synchronous>, transform_indices = @transform_5, window_bounds = array<i64: 64, 10>}, {pipeline_mode = #tpu.pipeline_mode<synchronous>, transform_indices = @transform_6, window_bounds = array<i64: 1, 10>}, {transform_indices = @transform_7, window_bounds = array<i64: 16, 10>}]} {
    %c0 = arith.constant 0 : index
    %c0_0 = arith.constant 0 : index
    %0 = vector.load %arg1[%c0, %c0_0] : memref<16x784xf32, #tpu.memory_space<vmem>>, vector<16x784xf32>
    %c0_1 = arith.constant 0 : index
    %c0_2 = arith.constant 0 : index
    %1 = vector.load %arg2[%c0_1, %c0_2] : memref<784x128xf32, #tpu.memory_space<vmem>>, vector<784x128xf32>
    %cst = arith.constant dense<0.000000e+00> : vector<16x128xf32>
    %2 = tpu.matmul %0, %1, %cst {dimension_numbers = #tpu.dot_dimension_numbers<[1], [0], [0], [1], [0, 0, 1, 1], [], []>} : vector<16x784xf32>, vector<784x128xf32>, vector<16x128xf32> -> vector<16x128xf32>
    %c0_3 = arith.constant 0 : index
    %c0_4 = arith.constant 0 : index
    %3 = vector.load %arg3[%c0_3, %c0_4] : memref<1x128xf32, #tpu.memory_space<vmem>>, vector<1x128xf32>
    %4 = vector.broadcast %3 : vector<1x128xf32> to vector<16x128xf32>
    %5 = arith.addf %2, %4 : vector<16x128xf32>
    %cst_5 = arith.constant 0.000000e+00 : f32
    %6 = vector.broadcast %cst_5 : f32 to vector<16x128xf32>
    %7 = arith.maximumf %5, %6 : vector<16x128xf32>
    %c0_6 = arith.constant 0 : index
    %c0_7 = arith.constant 0 : index
    %8 = vector.load %arg4[%c0_6, %c0_7] : memref<128x64xf32, #tpu.memory_space<vmem>>, vector<128x64xf32>
    %cst_8 = arith.constant dense<0.000000e+00> : vector<16x64xf32>
    %9 = tpu.matmul %7, %8, %cst_8 {dimension_numbers = #tpu.dot_dimension_numbers<[1], [0], [0], [1], [0, 0, 1, 1], [], []>} : vector<16x128xf32>, vector<128x64xf32>, vector<16x64xf32> -> vector<16x64xf32>
    %c0_9 = arith.constant 0 : index
    %c0_10 = arith.constant 0 : index
    %10 = vector.load %arg5[%c0_9, %c0_10] : memref<1x64xf32, #tpu.memory_space<vmem>>, vector<1x64xf32>
    %11 = vector.broadcast %10 : vector<1x64xf32> to vector<16x64xf32>
    %12 = arith.addf %9, %11 : vector<16x64xf32>
    %cst_11 = arith.constant 0.000000e+00 : f32
    %13 = vector.broadcast %cst_11 : f32 to vector<16x64xf32>
    %14 = arith.maximumf %12, %13 : vector<16x64xf32>
    %c0_12 = arith.constant 0 : index
    %c0_13 = arith.constant 0 : index
    %15 = vector.load %arg6[%c0_12, %c0_13] : memref<64x10xf32, #tpu.memory_space<vmem>>, vector<64x10xf32>
    %cst_14 = arith.constant dense<0.000000e+00> : vector<16x10xf32>
    %16 = tpu.matmul %14, %15, %cst_14 {dimension_numbers = #tpu.dot_dimension_numbers<[1], [0], [0], [1], [0, 0, 1, 1], [], []>} : vector<16x64xf32>, vector<64x10xf32>, vector<16x10xf32> -> vector<16x10xf32>
    %c0_15 = arith.constant 0 : index
    %c0_16 = arith.constant 0 : index
    %17 = vector.load %arg7[%c0_15, %c0_16] : memref<1x10xf32, #tpu.memory_space<vmem>>, vector<1x10xf32>
    %18 = vector.broadcast %17 : vector<1x10xf32> to vector<16x10xf32>
    %19 = arith.addf %16, %18 : vector<16x10xf32>
    %c0_17 = arith.constant 0 : index
    %c0_18 = arith.constant 0 : index
    %20 = vector.load %arg8[%c0_17, %c0_18] : memref<16x10xf32, #tpu.memory_space<vmem>>, vector<16x10xf32>
    tpu.vector_store %arg8[%c0_17, %c0_18], %19 {strides = array<i32>} : memref<16x10xf32, #tpu.memory_space<vmem>>, vector<16x10xf32>,
    return
  }
  func.func @transform_0(%arg0: i32) -> (i32, i32) {
    %c0_i32 = arith.constant 0 : i32
    %c0_i32_0 = arith.constant 0 : i32
    return %arg0, %c0_i32 : i32, i32
  }
  func.func @transform_1(%arg0: i32) -> (i32, i32) {
    %c0_i32 = arith.constant 0 : i32
    %c0_i32_0 = arith.constant 0 : i32
    %c0_i32_1 = arith.constant 0 : i32
    return %c0_i32, %c0_i32_0 : i32, i32
  }
  func.func @transform_2(%arg0: i32) -> (i32, i32) {
    %c0_i32 = arith.constant 0 : i32
    %c0_i32_0 = arith.constant 0 : i32
    %c0_i32_1 = arith.constant 0 : i32
    return %c0_i32, %c0_i32_0 : i32, i32
  }
  func.func @transform_3(%arg0: i32) -> (i32, i32) {
    %c0_i32 = arith.constant 0 : i32
    %c0_i32_0 = arith.constant 0 : i32
    %c0_i32_1 = arith.constant 0 : i32
    return %c0_i32, %c0_i32_0 : i32, i32
  }
  func.func @transform_4(%arg0: i32) -> (i32, i32) {
    %c0_i32 = arith.constant 0 : i32
    %c0_i32_0 = arith.constant 0 : i32
    %c0_i32_1 = arith.constant 0 : i32
    return %c0_i32, %c0_i32_0 : i32, i32
  }
  func.func @transform_5(%arg0: i32) -> (i32, i32) {
    %c0_i32 = arith.constant 0 : i32
    %c0_i32_0 = arith.constant 0 : i32
    %c0_i32_1 = arith.constant 0 : i32
    return %c0_i32, %c0_i32_0 : i32, i32
  }
  func.func @transform_6(%arg0: i32) -> (i32, i32) {
    %c0_i32 = arith.constant 0 : i32
    %c0_i32_0 = arith.constant 0 : i32
    %c0_i32_1 = arith.constant 0 : i32
    return %c0_i32, %c0_i32_0 : i32, i32
  }
  func.func @transform_7(%arg0: i32) -> (i32, i32) {
    %c0_i32 = arith.constant 0 : i32
    %c0_i32_0 = arith.constant 0 : i32
    return %arg0, %c0_i32 : i32, i32
  }
}

</mosaic_0001>

<llo_original>
// kernel: tpu_custom_call.1
$region0: #{tpu_custom_call.1}
  #allocation0 [shape = 'u32[]', space=smem, size = 0x4, offset = 0x4, fixed_abs, tag = 'smem constant byte address 0x4 - core index']
  #allocation1 [shape = 'u32[144,128]{1,0:T(1,128)}', space=vmem, size = 0x12000, scoped, tag = 'internal scratch']
  %s0 = inlined_call_operand.vmem [shape: f32[4,784], index: 0, kind: input, shape index: {}]
  %s1 = inlined_call_operand.hbm [shape: f32[784,128], index: 1, kind: input, shape index: {}]
  %s2 = inlined_call_operand.vmem [shape: f32[1,128], index: 2, kind: input, shape index: {}]
  %s3 = inlined_call_operand.vmem [shape: f32[128,64], index: 3, kind: input, shape index: {}]
  %s4 = inlined_call_operand.vmem [shape: f32[1,64], index: 4, kind: input, shape index: {}]
  %s5 = inlined_call_operand.vmem [shape: f32[64,10], index: 5, kind: input, shape index: {}]
  %s6 = inlined_call_operand.vmem [shape: f32[1,10], index: 6, kind: input, shape index: {}]
  %s7 = inlined_call_operand.hbm [shape: f32[4,10], index: 7, kind: output, shape index: {}]
  %s8 = sld [smem:[#allocation0]]
  $region42: #{tpu_custom_call.1} parent=0
    _
  %s10 = ssub.s32 1, %s8
  %s11 = scalar_select 0, %s10, %s8
  $region1: #{tpu_custom_call.1} parent=0
    #allocation2 [shape = 'u8[401408]{0}', space=vmem, size = 0x62000, scoped, tag = 'input window, operand 1, single buffered']
    #allocation3 [shape = 's32[1]{0}', space=sflag, size = 0x4, scoped, tag = 'scoped memory for tpu_custom_call.1']
    #allocation4 [shape = 's32[1]{0}', space=sflag, size = 0x4, scoped, tag = 'scoped memory for tpu_custom_call.1']
    #allocation5 [shape = 'u8[8192]{0}', space=vmem, size = 0x2000, scoped, tag = 'output window, operand 0, single buffered']
    %12 = vsyncpa [#allocation3], 0
    %13 = vsyncpa [#allocation4], 0
    // Predicated region
    $region2: #{tpu_custom_call.1} parent=1 // pred_check
      _
    $region3: #{tpu_custom_call.1} parent=1 // pred_check_branch
      %15 = sbr.rel (0) target = $region5
    $region4: #{tpu_custom_call.1} parent=1 // pred_region
      _
    $region5: #{tpu_custom_call.1} parent=1 // pred_fallthru
      _
    // Predicated region
    $region6: #{tpu_custom_call.1} parent=1 // pred_check
      _
    $region7: #{tpu_custom_call.1} parent=1 // pred_check_branch
      %17 = sbr.rel (0) target = $region9
    $region8: #{tpu_custom_call.1} parent=1 // pred_region
      %s19 = ssub.s32 12544, 12544
      %20 = vsyncadd [#allocation3], %s19
      %s21 = sshll.u32 [#allocation2], 4
      %s22 = int_to_ptr.vmem [resolvable:$true] %s21
      %27 = dma.hbm_to_vmem [thread:$0]  %s1, 12544, %s22, [#allocation3], 128, 128, 8
    $region9: #{tpu_custom_call.1} parent=1 // pred_fallthru
      _
    // Predicated region
    $region10: #{tpu_custom_call.1} parent=1 // pred_check
      _
    $region11: #{tpu_custom_call.1} parent=1 // pred_check_branch
      %29 = sbr.rel (0) target = $region13
    $region12: #{tpu_custom_call.1} parent=1 // pred_region
      _
    $region13: #{tpu_custom_call.1} parent=1 // pred_fallthru
      _
    // Predicated region
    $region14: #{tpu_custom_call.1} parent=1 // pred_check
      _
    $region15: #{tpu_custom_call.1} parent=1 // pred_check_branch
      %31 = sbr.rel (0) target = $region17
    $region16: #{tpu_custom_call.1} parent=1 // pred_region
      _
    $region17: #{tpu_custom_call.1} parent=1 // pred_fallthru
      _
    // Predicated region
    $region18: #{tpu_custom_call.1} parent=1 // pred_check
      _
    $region19: #{tpu_custom_call.1} parent=1 // pred_check_branch
      %33 = sbr.rel (0) target = $region21
    $region20: #{tpu_custom_call.1} parent=1 // pred_region
      _
    $region21: #{tpu_custom_call.1} parent=1 // pred_fallthru
      _
    // Predicated region
    $region22: #{tpu_custom_call.1} parent=1 // pred_check
      _
    $region23: #{tpu_custom_call.1} parent=1 // pred_check_branch
      %35 = sbr.rel (0) target = $region25
    $region24: #{tpu_custom_call.1} parent=1 // pred_region
      _
    $region25: #{tpu_custom_call.1} parent=1 // pred_fallthru
      _
    // Predicated region
    $region26: #{tpu_custom_call.1} parent=1 // pred_check
      _
    $region27: #{tpu_custom_call.1} parent=1 // pred_check_branch
      %37 = sbr.rel (0) target = $region29
    $region28: #{tpu_custom_call.1} parent=1 // pred_region
      _
    $region29: #{tpu_custom_call.1} parent=1 // pred_fallthru
      _
    // Predicated region
    $region30: #{tpu_custom_call.1} parent=1 // pred_check
      _
    $region31: #{tpu_custom_call.1} parent=1 // pred_check_branch
      %39 = sbr.rel (0) target = $region33
    $region32: #{tpu_custom_call.1} parent=1 // pred_region
      %40 = dma.done [#allocation3], 12544
    $region33: #{tpu_custom_call.1} parent=1 // pred_fallthru
      _
    %v41 = vld [vmem:[%s0] sm:$0xff]
    %v42 = vld [vmem:[%s0 + $0x8] sm:$0xff]
    %v43 = vld [vmem:[%s0 + $0x10] sm:$0xff]
    %v44 = vld [vmem:[%s0 + $0x18] sm:$0xf]
    %v45 = vld [vmem:[%s0 + $0x1c] sm:$0xff]
    %v46 = vld [vmem:[%s0 + $0x24] sm:$0xff]
    %v47 = vld [vmem:[%s0 + $0x2c] sm:$0xff]
    %v48 = vld [vmem:[%s0 + $0x34] sm:$0xf]
    %v49 = vld [vmem:[%s0 + $0x38] sm:$0xff]
    %v50 = vld [vmem:[%s0 + $0x40] sm:$0xff]
    %v51 = vld [vmem:[%s0 + $0x48] sm:$0xff]
    %v52 = vld [vmem:[%s0 + $0x50] sm:$0xf]
    %v53 = vld [vmem:[%s0 + $0x54] sm:$0xff]
    %v54 = vld [vmem:[%s0 + $0x5c] sm:$0xff]
    %v55 = vld [vmem:[%s0 + $0x64] sm:$0xff]
    %v56 = vld [vmem:[%s0 + $0x6c] sm:$0xf]
    %v57 = vld [vmem:[#allocation2] sm:$0xff]
    %v58 = vld [vmem:[#allocation2 + $0x8] sm:$0xff]
    %v59 = vld [vmem:[#allocation2 + $0x10] sm:$0xff]
    %v60 = vld [vmem:[#allocation2 + $0x18] sm:$0xff]
    %v61 = vld [vmem:[#allocation2 + $0x20] sm:$0xff]
    %v62 = vld [vmem:[#allocation2 + $0x28] sm:$0xff]
    %v63 = vld [vmem:[#allocation2 + $0x30] sm:$0xff]
    %v64 = vld [vmem:[#allocation2 + $0x38] sm:$0xff]
    %v65 = vld [vmem:[#allocation2 + $0x40] sm:$0xff]
    %v66 = vld [vmem:[#allocation2 + $0x48] sm:$0xff]
    %v67 = vld [vmem:[#allocation2 + $0x50] sm:$0xff]
    %v68 = vld [vmem:[#allocation2 + $0x58] sm:$0xff]
    %v69 = vld [vmem:[#allocation2 + $0x60] sm:$0xff]
    %v70 = vld [vmem:[#allocation2 + $0x68] sm:$0xff]
    %v71 = vld [vmem:[#allocation2 + $0x70] sm:$0xff]
    %v72 = vld [vmem:[#allocation2 + $0x78] sm:$0xff]
    %v73 = vld [vmem:[#allocation2 + $0x80] sm:$0xff]
    %v74 = vld [vmem:[#allocation2 + $0x88] sm:$0xff]
    %v75 = vld [vmem:[#allocation2 + $0x90] sm:$0xff]
    %v76 = vld [vmem:[#allocation2 + $0x98] sm:$0xff]
    %v77 = vld [vmem:[#allocation2 + $0xa0] sm:$0xff]
    %v78 = vld [vmem:[#allocation2 + $0xa8] sm:$0xff]
    %v79 = vld [vmem:[#allocation2 + $0xb0] sm:$0xff]
    %v80 = vld [vmem:[#allocation2 + $0xb8] sm:$0xff]
    %v81 = vld [vmem:[#allocation2 + $0xc0] sm:$0xff]
    %v82 = vld [vmem:[#allocation2 + $0xc8] sm:$0xff]
    %v83 = vld [vmem:[#allocation2 + $0xd0] sm:$0xff]
    %v84 = vld [vmem:[#allocation2 + $0xd8] sm:$0xff]
    %v85 = vld [vmem:[#allocation2 + $0xe0] sm:$0xff]
    %v86 = vld [vmem:[#allocation2 + $0xe8] sm:$0xff]
    %v87 = vld [vmem:[#allocation2 + $0xf0] sm:$0xff]
    %v88 = vld [vmem:[#allocation2 + $0xf8] sm:$0xff]
    %v89 = vld [vmem:[#allocation2 + $0x100] sm:$0xff]
    %v90 = vld [vmem:[#allocation2 + $0x108] sm:$0xff]
    %v91 = vld [vmem:[#allocation2 + $0x110] sm:$0xff]
    %v92 = vld [vmem:[#allocation2 + $0x118] sm:$0xff]
    %v93 = vld [vmem:[#allocation2 + $0x120] sm:$0xff]
    %v94 = vld [vmem:[#allocation2 + $0x128] sm:$0xff]
    %v95 = vld [vmem:[#allocation2 + $0x130] sm:$0xff]
    %v96 = vld [vmem:[#allocation2 + $0x138] sm:$0xff]
    %v97 = vld [vmem:[#allocation2 + $0x140] sm:$0xff]
    %v98 = vld [vmem:[#allocation2 + $0x148] sm:$0xff]
    %v99 = vld [vmem:[#allocation2 + $0x150] sm:$0xff]
    %v100 = vld [vmem:[#allocation2 + $0x158] sm:$0xff]
    %v101 = vld [vmem:[#allocation2 + $0x160] sm:$0xff]
    %v102 = vld [vmem:[#allocation2 + $0x168] sm:$0xff]
    %v103 = vld [vmem:[#allocation2 + $0x170] sm:$0xff]
    %v104 = vld [vmem:[#allocation2 + $0x178] sm:$0xff]
    %v105 = vld [vmem:[#allocation2 + $0x180] sm:$0xff]
    %v106 = vld [vmem:[#allocation2 + $0x188] sm:$0xff]
    %v107 = vld [vmem:[#allocation2 + $0x190] sm:$0xff]
    %v108 = vld [vmem:[#allocation2 + $0x198] sm:$0xff]
    %v109 = vld [vmem:[#allocation2 + $0x1a0] sm:$0xff]
    %v110 = vld [vmem:[#allocation2 + $0x1a8] sm:$0xff]
    %v111 = vld [vmem:[#allocation2 + $0x1b0] sm:$0xff]
    %v112 = vld [vmem:[#allocation2 + $0x1b8] sm:$0xff]
    %v113 = vld [vmem:[#allocation2 + $0x1c0] sm:$0xff]
    %v114 = vld [vmem:[#allocation2 + $0x1c8] sm:$0xff]
    %v115 = vld [vmem:[#allocation2 + $0x1d0] sm:$0xff]
    %v116 = vld [vmem:[#allocation2 + $0x1d8] sm:$0xff]
    %v117 = vld [vmem:[#allocation2 + $0x1e0] sm:$0xff]
    %v118 = vld [vmem:[#allocation2 + $0x1e8] sm:$0xff]
    %v119 = vld [vmem:[#allocation2 + $0x1f0] sm:$0xff]
    %v120 = vld [vmem:[#allocation2 + $0x1f8] sm:$0xff]
    %v121 = vld [vmem:[#allocation2 + $0x200] sm:$0xff]
    %v122 = vld [vmem:[#allocation2 + $0x208] sm:$0xff]
    %v123 = vld [vmem:[#allocation2 + $0x210] sm:$0xff]
    %v124 = vld [vmem:[#allocation2 + $0x218] sm:$0xff]
    %v125 = vld [vmem:[#allocation2 + $0x220] sm:$0xff]
    %v126 = vld [vmem:[#allocation2 + $0x228] sm:$0xff]
    %v127 = vld [vmem:[#allocation2 + $0x230] sm:$0xff]
    %v128 = vld [vmem:[#allocation2 + $0x238] sm:$0xff]
    %v129 = vld [vmem:[#allocation2 + $0x240] sm:$0xff]
    %v130 = vld [vmem:[#allocation2 + $0x248] sm:$0xff]
    %v131 = vld [vmem:[#allocation2 + $0x250] sm:$0xff]
    %v132 = vld [vmem:[#allocation2 + $0x258] sm:$0xff]
    %v133 = vld [vmem:[#allocation2 + $0x260] sm:$0xff]
    %v134 = vld [vmem:[#allocation2 + $0x268] sm:$0xff]
    %v135 = vld [vmem:[#allocation2 + $0x270] sm:$0xff]
    %v136 = vld [vmem:[#allocation2 + $0x278] sm:$0xff]
    %v137 = vld [vmem:[#allocation2 + $0x280] sm:$0xff]
    %v138 = vld [vmem:[#allocation2 + $0x288] sm:$0xff]
    %v139 = vld [vmem:[#allocation2 + $0x290] sm:$0xff]
    %v140 = vld [vmem:[#allocation2 + $0x298] sm:$0xff]
    %v141 = vld [vmem:[#allocation2 + $0x2a0] sm:$0xff]
    %v142 = vld [vmem:[#allocation2 + $0x2a8] sm:$0xff]
    %v143 = vld [vmem:[#allocation2 + $0x2b0] sm:$0xff]
    %v144 = vld [vmem:[#allocation2 + $0x2b8] sm:$0xff]
    %v145 = vld [vmem:[#allocation2 + $0x2c0] sm:$0xff]
    %v146 = vld [vmem:[#allocation2 + $0x2c8] sm:$0xff]
    %v147 = vld [vmem:[#allocation2 + $0x2d0] sm:$0xff]
    %v148 = vld [vmem:[#allocation2 + $0x2d8] sm:$0xff]
    %v149 = vld [vmem:[#allocation2 + $0x2e0] sm:$0xff]
    %v150 = vld [vmem:[#allocation2 + $0x2e8] sm:$0xff]
    %v151 = vld [vmem:[#allocation2 + $0x2f0] sm:$0xff]
    %v152 = vld [vmem:[#allocation2 + $0x2f8] sm:$0xff]
    %v153 = vld [vmem:[#allocation2 + $0x300] sm:$0xff]
    %v154 = vld [vmem:[#allocation2 + $0x308] sm:$0xff]
    %v155 = vld [vmem:[%s2] sm:$0x1]
    %v157 = vlaneseq
    %v158 = vshrl.u32 %v157, 7
    %v159 = vsub.s32 0, %v158
    %v160 = vrot.slane %v155, %v159
    %v178 = vcombine.low %v41, %v45
    %v179 = vcombine.high %v41, %v45
    %v180 = vcombine.low %v42, %v46
    %v181 = vcombine.high %v42, %v46
    %v182 = vcombine.low %v43, %v47
    %v183 = vcombine.high %v43, %v47
    %v184 = vcombine.low %v44, %v48
    %v185 = vcombine.low %v49, %v53
    %v186 = vcombine.high %v49, %v53
    %v187 = vcombine.low %v50, %v54
    %v188 = vcombine.high %v50, %v54
    %v189 = vcombine.low %v51, %v55
    %v190 = vcombine.high %v51, %v55
    %v191 = vcombine.low %v52, %v56
    %vm204 = vcmask 130048
    %v205 = vsel %vm204, %v184, 0
    %v207 = vsel %vm204, %v191, 0
    %209 = vmatprep.subr.mxu0 0.0
    %210 = vmatpush1.msra.mxu0 %v57
    %211 = vmatprep.subr.mxu0 0.0
    %212 = vmatpush1.msra.mxu0 %v58
    %213 = vmatprep.subr.mxu0 0.0
    %214 = vmatpush1.msra.mxu0 %v59
    %215 = vmatprep.subr.mxu0 0.0
    %216 = vmatpush1.msra.mxu0 %v60
    %217 = vmatprep.subr.mxu0 0.0
    %218 = vmatpush1.msra.mxu0 %v61
    %219 = vmatprep.subr.mxu0 0.0
    %220 = vmatpush1.msra.mxu0 %v62
    %221 = vmatprep.subr.mxu0 0.0
    %222 = vmatpush1.msra.mxu0 %v63
    %223 = vmatprep.subr.mxu0 0.0
    %224 = vmatpush1.msra.mxu0 %v64
    %225 = vmatprep.subr.mxu0 0.0
    %226 = vmatpush1.msra.mxu0 %v65
    %227 = vmatprep.subr.mxu0 0.0
    %228 = vmatpush1.msra.mxu0 %v66
    %229 = vmatprep.subr.mxu0 0.0
    %230 = vmatpush1.msra.mxu0 %v67
    %231 = vmatprep.subr.mxu0 0.0
    %232 = vmatpush1.msra.mxu0 %v68
    %233 = vmatprep.subr.mxu0 0.0
    %234 = vmatpush1.msra.mxu0 %v69
    %235 = vmatprep.subr.mxu0 0.0
    %236 = vmatpush1.msra.mxu0 %v70
    %237 = vmatprep.subr.mxu0 0.0
    %238 = vmatpush1.msra.mxu0 %v71
    %239 = vmatprep.subr.mxu0 0.0
    %240 = vmatpush1.msra.mxu0 %v72
    %241 = vmatprep.subr.mxu0 0.0
    %242 = vmatpush1.msra.mxu0 %v73
    %243 = vmatprep.subr.mxu0 0.0
    %244 = vmatpush1.msra.mxu0 %v74
    %245 = vmatprep.subr.mxu0 0.0
    %246 = vmatpush1.msra.mxu0 %v75
    %247 = vmatprep.subr.mxu0 0.0
    %248 = vmatpush1.msra.mxu0 %v76
    %249 = vmatprep.subr.mxu0 0.0
    %250 = vmatpush1.msra.mxu0 %v77
    %251 = vmatprep.subr.mxu0 0.0
    %252 = vmatpush1.msra.mxu0 %v78
    %253 = vmatprep.subr.mxu0 0.0
    %254 = vmatpush1.msra.mxu0 %v79
    %255 = vmatprep.subr.mxu0 0.0
    %256 = vmatpush1.msra.mxu0 %v80
    %257 = vmatprep.subr.mxu0 0.0
    %258 = vmatpush1.msra.mxu0 %v81
    %259 = vmatprep.subr.mxu0 0.0
    %260 = vmatpush1.msra.mxu0 %v82
    %261 = vmatprep.subr.mxu0 0.0
    %262 = vmatpush1.msra.mxu0 %v83
    %263 = vmatprep.subr.mxu0 0.0
    %264 = vmatpush1.msra.mxu0 %v84
    %265 = vmatprep.subr.mxu0 0.0
    %266 = vmatpush1.msra.mxu0 %v85
    %267 = vmatprep.subr.mxu0 0.0
    %268 = vmatpush1.msra.mxu0 %v86
    %269 = vmatprep.subr.mxu0 0.0
    %270 = vmatpush1.msra.mxu0 %v87
    %271 = vmatprep.subr.mxu0 0.0
    %272 = vmatpush1.msra.mxu0 %v88
    %273 = vmatprep.mubr.f32.mxu0 %v179
    %274 = vmatmul.mubr.f32.gmra.mrb[0].mxu0 %v178
    %v275 = vpop.f32.mrb[0].mxu0
    %v276 = vadd.f32 %v160, %v275
    %v277 = vpop.f32.mrb[0].mxu0
    %278 = vmatprep.mubr.f32.mxu0 %v186
    %279 = vmatmul.mubr.f32.gmra.mrb[0].mxu0 %v185
    %v280 = vpop.f32.mrb[0].mxu0
    %v281 = vadd.f32 %v160, %v280
    %v282 = vpop.f32.mrb[0].mxu0
    %283 = vdwg.mxu0
    %284 = vmatprep.subr.mxu0 0.0
    %285 = vmatpush1.msra.mxu0 %v89
    %286 = vmatprep.subr.mxu0 0.0
    %287 = vmatpush1.msra.mxu0 %v90
    %288 = vmatprep.subr.mxu0 0.0
    %289 = vmatpush1.msra.mxu0 %v91
    %290 = vmatprep.subr.mxu0 0.0
    %291 = vmatpush1.msra.mxu0 %v92
    %292 = vmatprep.subr.mxu0 0.0
    %293 = vmatpush1.msra.mxu0 %v93
    %294 = vmatprep.subr.mxu0 0.0
    %295 = vmatpush1.msra.mxu0 %v94
    %296 = vmatprep.subr.mxu0 0.0
    %297 = vmatpush1.msra.mxu0 %v95
    %298 = vmatprep.subr.mxu0 0.0
    %299 = vmatpush1.msra.mxu0 %v96
    %300 = vmatprep.subr.mxu0 0.0
    %301 = vmatpush1.msra.mxu0 %v97
    %302 = vmatprep.subr.mxu0 0.0
    %303 = vmatpush1.msra.mxu0 %v98
    %304 = vmatprep.subr.mxu0 0.0
    %305 = vmatpush1.msra.mxu0 %v99
    %306 = vmatprep.subr.mxu0 0.0
    %307 = vmatpush1.msra.mxu0 %v100
    %308 = vmatprep.subr.mxu0 0.0
    %309 = vmatpush1.msra.mxu0 %v101
    %310 = vmatprep.subr.mxu0 0.0
    %311 = vmatpush1.msra.mxu0 %v102
    %312 = vmatprep.subr.mxu0 0.0
    %313 = vmatpush1.msra.mxu0 %v103
    %314 = vmatprep.subr.mxu0 0.0
    %315 = vmatpush1.msra.mxu0 %v104
    %316 = vmatprep.subr.mxu0 0.0
    %317 = vmatpush1.msra.mxu0 %v105
    %318 = vmatprep.subr.mxu0 0.0
    %319 = vmatpush1.msra.mxu0 %v106
    %320 = vmatprep.subr.mxu0 0.0
    %321 = vmatpush1.msra.mxu0 %v107
    %322 = vmatprep.subr.mxu0 0.0
    %323 = vmatpush1.msra.mxu0 %v108
    %324 = vmatprep.subr.mxu0 0.0
    %325 = vmatpush1.msra.mxu0 %v109
    %326 = vmatprep.subr.mxu0 0.0
    %327 = vmatpush1.msra.mxu0 %v110
    %328 = vmatprep.subr.mxu0 0.0
    %329 = vmatpush1.msra.mxu0 %v111
    %330 = vmatprep.subr.mxu0 0.0
    %331 = vmatpush1.msra.mxu0 %v112
    %332 = vmatprep.subr.mxu0 0.0
    %333 = vmatpush1.msra.mxu0 %v113
    %334 = vmatprep.subr.mxu0 0.0
    %335 = vmatpush1.msra.mxu0 %v114
    %336 = vmatprep.subr.mxu0 0.0
    %337 = vmatpush1.msra.mxu0 %v115
    %338 = vmatprep.subr.mxu0 0.0
    %339 = vmatpush1.msra.mxu0 %v116
    %340 = vmatprep.subr.mxu0 0.0
    %341 = vmatpush1.msra.mxu0 %v117
    %342 = vmatprep.subr.mxu0 0.0
    %343 = vmatpush1.msra.mxu0 %v118
    %344 = vmatprep.subr.mxu0 0.0
    %345 = vmatpush1.msra.mxu0 %v119
    %346 = vmatprep.subr.mxu0 0.0
    %347 = vmatpush1.msra.mxu0 %v120
    %348 = vmatprep.mubr.f32.mxu0 %v181
    %349 = vmatmul.mubr.f32.gmra.mrb[0].mxu0 %v180
    %v350 = vpop.f32.mrb[0].mxu0
    %v351 = vadd.f32 %v276, %v350
    %v352 = vpop.f32.mrb[0].mxu0
    %353 = vmatprep.mubr.f32.mxu0 %v188
    %354 = vmatmul.mubr.f32.gmra.mrb[0].mxu0 %v187
    %v355 = vpop.f32.mrb[0].mxu0
    %v356 = vadd.f32 %v281, %v355
    %v357 = vpop.f32.mrb[0].mxu0
    %358 = vdwg.mxu0
    %359 = vmatprep.subr.mxu0 0.0
    %360 = vmatpush1.msra.mxu0 %v121
    %361 = vmatprep.subr.mxu0 0.0
    %362 = vmatpush1.msra.mxu0 %v122
    %363 = vmatprep.subr.mxu0 0.0
    %364 = vmatpush1.msra.mxu0 %v123
    %365 = vmatprep.subr.mxu0 0.0
    %366 = vmatpush1.msra.mxu0 %v124
    %367 = vmatprep.subr.mxu0 0.0
    %368 = vmatpush1.msra.mxu0 %v125
    %369 = vmatprep.subr.mxu0 0.0
    %370 = vmatpush1.msra.mxu0 %v126
    %371 = vmatprep.subr.mxu0 0.0
    %372 = vmatpush1.msra.mxu0 %v127
    %373 = vmatprep.subr.mxu0 0.0
    %374 = vmatpush1.msra.mxu0 %v128
    %375 = vmatprep.subr.mxu0 0.0
    %376 = vmatpush1.msra.mxu0 %v129
    %377 = vmatprep.subr.mxu0 0.0
    %378 = vmatpush1.msra.mxu0 %v130
    %379 = vmatprep.subr.mxu0 0.0
    %380 = vmatpush1.msra.mxu0 %v131
    %381 = vmatprep.subr.mxu0 0.0
    %382 = vmatpush1.msra.mxu0 %v132
    %383 = vmatprep.subr.mxu0 0.0
    %384 = vmatpush1.msra.mxu0 %v133
    %385 = vmatprep.subr.mxu0 0.0
    %386 = vmatpush1.msra.mxu0 %v134
    %387 = vmatprep.subr.mxu0 0.0
    %388 = vmatpush1.msra.mxu0 %v135
    %389 = vmatprep.subr.mxu0 0.0
    %390 = vmatpush1.msra.mxu0 %v136
    %391 = vmatprep.subr.mxu0 0.0
    %392 = vmatpush1.msra.mxu0 %v137
    %393 = vmatprep.subr.mxu0 0.0
    %394 = vmatpush1.msra.mxu0 %v138
    %395 = vmatprep.subr.mxu0 0.0
    %396 = vmatpush1.msra.mxu0 %v139
    %397 = vmatprep.subr.mxu0 0.0
    %398 = vmatpush1.msra.mxu0 %v140
    %399 = vmatprep.subr.mxu0 0.0
    %400 = vmatpush1.msra.mxu0 %v141
    %401 = vmatprep.subr.mxu0 0.0
    %402 = vmatpush1.msra.mxu0 %v142
    %403 = vmatprep.subr.mxu0 0.0
    %404 = vmatpush1.msra.mxu0 %v143
    %405 = vmatprep.subr.mxu0 0.0
    %406 = vmatpush1.msra.mxu0 %v144
    %407 = vmatprep.subr.mxu0 0.0
    %408 = vmatpush1.msra.mxu0 %v145
    %409 = vmatprep.subr.mxu0 0.0
    %410 = vmatpush1.msra.mxu0 %v146
    %411 = vmatprep.subr.mxu0 0.0
    %412 = vmatpush1.msra.mxu0 %v147
    %413 = vmatprep.subr.mxu0 0.0
    %414 = vmatpush1.msra.mxu0 %v148
    %415 = vmatprep.subr.mxu0 0.0
    %416 = vmatpush1.msra.mxu0 %v149
    %417 = vmatprep.subr.mxu0 0.0
    %418 = vmatpush1.msra.mxu0 %v150
    %419 = vmatprep.subr.mxu0 0.0
    %420 = vmatpush1.msra.mxu0 %v151
    %421 = vmatprep.subr.mxu0 0.0
    %422 = vmatpush1.msra.mxu0 %v152
    %423 = vmatprep.mubr.f32.mxu0 %v183
    %424 = vmatmul.mubr.f32.gmra.mrb[0].mxu0 %v182
    %v425 = vpop.f32.mrb[0].mxu0
    %v426 = vadd.f32 %v351, %v425
    %v427 = vpop.f32.mrb[0].mxu0
    %428 = vmatprep.mubr.f32.mxu0 %v190
    %429 = vmatmul.mubr.f32.gmra.mrb[0].mxu0 %v189
    %v430 = vpop.f32.mrb[0].mxu0
    %v431 = vadd.f32 %v356, %v430
    %v432 = vpop.f32.mrb[0].mxu0
    %433 = vdwg.mxu0
    %434 = vmatprep.subr.mxu0 0.0
    %435 = vmatpush1.msra.mxu0 %v153
    %436 = vmatprep.subr.mxu0 0.0
    %437 = vmatpush1.msra.mxu0 %v154
    %438 = vmatprep.subr.mxu0 0.0
    %439 = vmatpush1.msra.mxu0 0.0
    %440 = vmatprep.subr.mxu0 0.0
    %441 = vmatpush1.msra.mxu0 0.0
    %442 = vmatprep.subr.mxu0 0.0
    %443 = vmatpush1.msra.mxu0 0.0
    %444 = vmatprep.subr.mxu0 0.0
    %445 = vmatpush1.msra.mxu0 0.0
    %446 = vmatprep.subr.mxu0 0.0
    %447 = vmatpush1.msra.mxu0 0.0
    %448 = vmatprep.subr.mxu0 0.0
    %449 = vmatpush1.msra.mxu0 0.0
    %450 = vmatprep.subr.mxu0 0.0
    %451 = vmatpush1.msra.mxu0 0.0
    %452 = vmatprep.subr.mxu0 0.0
    %453 = vmatpush1.msra.mxu0 0.0
    %454 = vmatprep.subr.mxu0 0.0
    %455 = vmatpush1.msra.mxu0 0.0
    %456 = vmatprep.subr.mxu0 0.0
    %457 = vmatpush1.msra.mxu0 0.0
    %458 = vmatprep.subr.mxu0 0.0
    %459 = vmatpush1.msra.mxu0 0.0
    %460 = vmatprep.subr.mxu0 0.0
    %461 = vmatpush1.msra.mxu0 0.0
    %462 = vmatprep.subr.mxu0 0.0
    %463 = vmatpush1.msra.mxu0 0.0
    %464 = vmatprep.subr.mxu0 0.0
    %465 = vmatpush1.msra.mxu0 0.0
    %466 = vmatprep.subr.mxu0 0.0
    %467 = vmatpush1.msra.mxu0 0.0
    %468 = vmatprep.subr.mxu0 0.0
    %469 = vmatpush1.msra.mxu0 0.0
    %470 = vmatprep.subr.mxu0 0.0
    %471 = vmatpush1.msra.mxu0 0.0
    %472 = vmatprep.subr.mxu0 0.0
    %473 = vmatpush1.msra.mxu0 0.0
    %474 = vmatprep.subr.mxu0 0.0
    %475 = vmatpush1.msra.mxu0 0.0
    %476 = vmatprep.subr.mxu0 0.0
    %477 = vmatpush1.msra.mxu0 0.0
    %478 = vmatprep.subr.mxu0 0.0
    %479 = vmatpush1.msra.mxu0 0.0
    %480 = vmatprep.subr.mxu0 0.0
    %481 = vmatpush1.msra.mxu0 0.0
    %482 = vmatprep.subr.mxu0 0.0
    %483 = vmatpush1.msra.mxu0 0.0
    %484 = vmatprep.subr.mxu0 0.0
    %485 = vmatpush1.msra.mxu0 0.0
    %486 = vmatprep.subr.mxu0 0.0
    %487 = vmatpush1.msra.mxu0 0.0
    %488 = vmatprep.subr.mxu0 0.0
    %489 = vmatpush1.msra.mxu0 0.0
    %490 = vmatprep.subr.mxu0 0.0
    %491 = vmatpush1.msra.mxu0 0.0
    %492 = vmatprep.subr.mxu0 0.0
    %493 = vmatpush1.msra.mxu0 0.0
    %494 = vmatprep.subr.mxu0 0.0
    %495 = vmatpush1.msra.mxu0 0.0
    %496 = vmatprep.subr.mxu0 0.0
    %497 = vmatpush1.msra.mxu0 0.0
    %498 = vmatprep.mubr.f32.mxu0 0.0
    %499 = vmatmul.mubr.f32.gmra.mrb[0].mxu0 %v205
    %v500 = vpop.f32.mrb[0].mxu0
    %v501 = vadd.f32 %v426, %v500
    %v502 = vpop.f32.mrb[0].mxu0
    %503 = vmatprep.mubr.f32.mxu0 0.0
    %504 = vmatmul.mubr.f32.gmra.mrb[0].mxu0 %v207
    %v505 = vpop.f32.mrb[0].mxu0
    %v506 = vadd.f32 %v431, %v505
    %v507 = vpop.f32.mrb[0].mxu0
    %508 = vdwg.mxu0
    %v509 = vmax.f32 %v501, 0.0
    %v510 = vmax.f32 %v506, 0.0
    %v511 = vld [vmem:[%s3] sm:$0xff]
    %v512 = vld [vmem:[%s3 + $0x8] sm:$0xff]
    %v513 = vld [vmem:[%s3 + $0x10] sm:$0xff]
    %v514 = vld [vmem:[%s3 + $0x18] sm:$0xff]
    %v515 = vld [vmem:[%s3 + $0x20] sm:$0xff]
    %v516 = vld [vmem:[%s3 + $0x28] sm:$0xff]
    %v517 = vld [vmem:[%s3 + $0x30] sm:$0xff]
    %v518 = vld [vmem:[%s3 + $0x38] sm:$0xff]
    %v519 = vld [vmem:[%s3 + $0x40] sm:$0xff]
    %v520 = vld [vmem:[%s3 + $0x48] sm:$0xff]
    %v521 = vld [vmem:[%s3 + $0x50] sm:$0xff]
    %v522 = vld [vmem:[%s3 + $0x58] sm:$0xff]
    %v523 = vld [vmem:[%s3 + $0x60] sm:$0xff]
    %v524 = vld [vmem:[%s3 + $0x68] sm:$0xff]
    %v525 = vld [vmem:[%s3 + $0x70] sm:$0xff]
    %v526 = vld [vmem:[%s3 + $0x78] sm:$0xff]
    %v527 = vld [vmem:[%s4] sm:$0x1]
    %v529 = vlaneseq
    %v530 = vshrl.u32 %v529, 7
    %v531 = vsub.s32 0, %v530
    %v532 = vrot.slane %v527, %v531
    %534 = vmatprep.subr.mxu0 0.0
    %535 = vmatpush1.msra.mxu0 %v511
    %536 = vmatprep.subr.mxu0 0.0
    %537 = vmatpush1.msra.mxu0 %v512
    %538 = vmatprep.subr.mxu0 0.0
    %539 = vmatpush1.msra.mxu0 %v513
    %540 = vmatprep.subr.mxu0 0.0
    %541 = vmatpush1.msra.mxu0 %v514
    %542 = vmatprep.subr.mxu0 0.0
    %543 = vmatpush1.msra.mxu0 %v515
    %544 = vmatprep.subr.mxu0 0.0
    %545 = vmatpush1.msra.mxu0 %v516
    %546 = vmatprep.subr.mxu0 0.0
    %547 = vmatpush1.msra.mxu0 %v517
    %548 = vmatprep.subr.mxu0 0.0
    %549 = vmatpush1.msra.mxu0 %v518
    %550 = vmatprep.subr.mxu0 0.0
    %551 = vmatpush1.msra.mxu0 %v519
    %552 = vmatprep.subr.mxu0 0.0
    %553 = vmatpush1.msra.mxu0 %v520
    %554 = vmatprep.subr.mxu0 0.0
    %555 = vmatpush1.msra.mxu0 %v521
    %556 = vmatprep.subr.mxu0 0.0
    %557 = vmatpush1.msra.mxu0 %v522
    %558 = vmatprep.subr.mxu0 0.0
    %559 = vmatpush1.msra.mxu0 %v523
    %560 = vmatprep.subr.mxu0 0.0
    %561 = vmatpush1.msra.mxu0 %v524
    %562 = vmatprep.subr.mxu0 0.0
    %563 = vmatpush1.msra.mxu0 %v525
    %564 = vmatprep.subr.mxu0 0.0
    %565 = vmatpush1.msra.mxu0 %v526
    %566 = vmatprep.subr.mxu0 0.0
    %567 = vmatpush1.msra.mxu0 0.0
    %568 = vmatprep.subr.mxu0 0.0
    %569 = vmatpush1.msra.mxu0 0.0
    %570 = vmatprep.subr.mxu0 0.0
    %571 = vmatpush1.msra.mxu0 0.0
    %572 = vmatprep.subr.mxu0 0.0
    %573 = vmatpush1.msra.mxu0 0.0
    %574 = vmatprep.subr.mxu0 0.0
    %575 = vmatpush1.msra.mxu0 0.0
    %576 = vmatprep.subr.mxu0 0.0
    %577 = vmatpush1.msra.mxu0 0.0
    %578 = vmatprep.subr.mxu0 0.0
    %579 = vmatpush1.msra.mxu0 0.0
    %580 = vmatprep.subr.mxu0 0.0
    %581 = vmatpush1.msra.mxu0 0.0
    %582 = vmatprep.subr.mxu0 0.0
    %583 = vmatpush1.msra.mxu0 0.0
    %584 = vmatprep.subr.mxu0 0.0
    %585 = vmatpush1.msra.mxu0 0.0
    %586 = vmatprep.subr.mxu0 0.0
    %587 = vmatpush1.msra.mxu0 0.0
    %588 = vmatprep.subr.mxu0 0.0
    %589 = vmatpush1.msra.mxu0 0.0
    %590 = vmatprep.subr.mxu0 0.0
    %591 = vmatpush1.msra.mxu0 0.0
    %592 = vmatprep.subr.mxu0 0.0
    %593 = vmatpush1.msra.mxu0 0.0
    %594 = vmatprep.subr.mxu0 0.0
    %595 = vmatpush1.msra.mxu0 0.0
    %596 = vmatprep.subr.mxu0 0.0
    %597 = vmatpush1.msra.mxu0 0.0
    %598 = vmatprep.mubr.f32.mxu0 0.0
    %599 = vmatmul.mubr.f32.gmra.mrb[0].mxu0 %v509
    %v600 = vpop.f32.mrb[0].mxu0
    %v601 = vadd.f32 %v532, %v600
    %v602 = vpop.f32.mrb[0].mxu0
    %603 = vmatprep.mubr.f32.mxu0 0.0
    %604 = vmatmul.mubr.f32.gmra.mrb[0].mxu0 %v510
    %v605 = vpop.f32.mrb[0].mxu0
    %v606 = vadd.f32 %v532, %v605
    %v607 = vpop.f32.mrb[0].mxu0
    %608 = vdwg.mxu0
    %v609 = vmax.f32 %v601, 0.0
    %v610 = vmax.f32 %v606, 0.0
    %v611 = vld [vmem:[%s5] sm:$0xff]
    %v612 = vld [vmem:[%s5 + $0x8] sm:$0xff]
    %v613 = vld [vmem:[%s5 + $0x10] sm:$0xff]
    %v614 = vld [vmem:[%s5 + $0x18] sm:$0xff]
    %v615 = vld [vmem:[%s5 + $0x20] sm:$0xff]
    %v616 = vld [vmem:[%s5 + $0x28] sm:$0xff]
    %v617 = vld [vmem:[%s5 + $0x30] sm:$0xff]
    %v618 = vld [vmem:[%s5 + $0x38] sm:$0xff]
    %v619 = vld [vmem:[%s6] sm:$0x1]
    %v621 = vlaneseq
    %v622 = vshrl.u32 %v621, 7
    %v623 = vsub.s32 0, %v622
    %v624 = vrot.slane %v619, %v623
    %vm626 = vcmask 523264
    %v628 = vsel %vm626, %v609, 0
    %v631 = vsel %vm626, %v610, 0
    %633 = vmatprep.subr.mxu0 0.0
    %634 = vmatpush1.msra.mxu0 %v611
    %635 = vmatprep.subr.mxu0 0.0
    %636 = vmatpush1.msra.mxu0 %v612
    %637 = vmatprep.subr.mxu0 0.0
    %638 = vmatpush1.msra.mxu0 %v613
    %639 = vmatprep.subr.mxu0 0.0
    %640 = vmatpush1.msra.mxu0 %v614
    %641 = vmatprep.subr.mxu0 0.0
    %642 = vmatpush1.msra.mxu0 %v615
    %643 = vmatprep.subr.mxu0 0.0
    %644 = vmatpush1.msra.mxu0 %v616
    %645 = vmatprep.subr.mxu0 0.0
    %646 = vmatpush1.msra.mxu0 %v617
    %647 = vmatprep.subr.mxu0 0.0
    %648 = vmatpush1.msra.mxu0 %v618
    %649 = vmatprep.subr.mxu0 0.0
    %650 = vmatpush1.msra.mxu0 0.0
    %651 = vmatprep.subr.mxu0 0.0
    %652 = vmatpush1.msra.mxu0 0.0
    %653 = vmatprep.subr.mxu0 0.0
    %654 = vmatpush1.msra.mxu0 0.0
    %655 = vmatprep.subr.mxu0 0.0
    %656 = vmatpush1.msra.mxu0 0.0
    %657 = vmatprep.subr.mxu0 0.0
    %658 = vmatpush1.msra.mxu0 0.0
    %659 = vmatprep.subr.mxu0 0.0
    %660 = vmatpush1.msra.mxu0 0.0
    %661 = vmatprep.subr.mxu0 0.0
    %662 = vmatpush1.msra.mxu0 0.0
    %663 = vmatprep.subr.mxu0 0.0
    %664 = vmatpush1.msra.mxu0 0.0
    %665 = vmatprep.subr.mxu0 0.0
    %666 = vmatpush1.msra.mxu0 0.0
    %667 = vmatprep.subr.mxu0 0.0
    %668 = vmatpush1.msra.mxu0 0.0
    %669 = vmatprep.subr.mxu0 0.0
    %670 = vmatpush1.msra.mxu0 0.0
    %671 = vmatprep.subr.mxu0 0.0
    %672 = vmatpush1.msra.mxu0 0.0
    %673 = vmatprep.subr.mxu0 0.0
    %674 = vmatpush1.msra.mxu0 0.0
    %675 = vmatprep.subr.mxu0 0.0
    %676 = vmatpush1.msra.mxu0 0.0
    %677 = vmatprep.subr.mxu0 0.0
    %678 = vmatpush1.msra.mxu0 0.0
    %679 = vmatprep.subr.mxu0 0.0
    %680 = vmatpush1.msra.mxu0 0.0
    %681 = vmatprep.subr.mxu0 0.0
    %682 = vmatpush1.msra.mxu0 0.0
    %683 = vmatprep.subr.mxu0 0.0
    %684 = vmatpush1.msra.mxu0 0.0
    %685 = vmatprep.subr.mxu0 0.0
    %686 = vmatpush1.msra.mxu0 0.0
    %687 = vmatprep.subr.mxu0 0.0
    %688 = vmatpush1.msra.mxu0 0.0
    %689 = vmatprep.subr.mxu0 0.0
    %690 = vmatpush1.msra.mxu0 0.0
    %691 = vmatprep.subr.mxu0 0.0
    %692 = vmatpush1.msra.mxu0 0.0
    %693 = vmatprep.subr.mxu0 0.0
    %694 = vmatpush1.msra.mxu0 0.0
    %695 = vmatprep.subr.mxu0 0.0
    %696 = vmatpush1.msra.mxu0 0.0
    %697 = vmatprep.mubr.f32.mxu0 0.0
    %698 = vmatmul.mubr.f32.gmra.mrb[0].mxu0 %v628
    %v699 = vpop.f32.mrb[0].mxu0
    %v700 = vadd.f32 %v624, %v699
    %v701 = vpop.f32.mrb[0].mxu0
    %702 = vmatprep.mubr.f32.mxu0 0.0
    %703 = vmatmul.mubr.f32.gmra.mrb[0].mxu0 %v631
    %v704 = vpop.f32.mrb[0].mxu0
    %v705 = vadd.f32 %v624, %v704
    %v706 = vpop.f32.mrb[0].mxu0
    %707 = vdwg.mxu0
    %vm708 = vcmask 80896
    %709 = vst.msk [vmem:[#allocation5] sm:$0xff] %vm708, %v700
    %710 = vst.msk [vmem:[#allocation5 + $0x8] sm:$0xff] %vm708, %v705
    // Predicated region
    $region34: #{tpu_custom_call.1} parent=1 // pred_check
      _
    $region35: #{tpu_custom_call.1} parent=1 // pred_check_branch
      %712 = sbr.rel (0) target = $region37
    $region36: #{tpu_custom_call.1} parent=1 // pred_region
      %s714 = ssub.s32 256, 64
      %715 = vsyncadd [#allocation4], %s714
      %s716 = sshll.u32 [#allocation5], 4
      %s717 = int_to_ptr.vmem [resolvable:$true] %s716
      %722 = dma.vmem_to_hbm [thread:$0]  %s717, 64, %s7, [#allocation4], 64, 64, 4
    $region37: #{tpu_custom_call.1} parent=1 // pred_fallthru
      _
    // Predicated region
    $region38: #{tpu_custom_call.1} parent=1 // pred_check
      _
    $region39: #{tpu_custom_call.1} parent=1 // pred_check_branch
      %724 = sbr.rel (0) target = $region41
    $region40: #{tpu_custom_call.1} parent=1 // pred_region
      %725 = dma.done [#allocation4], 256
    $region41: #{tpu_custom_call.1} parent=1 // pred_fallthru
      _
    %726 = vsyncpa [#allocation3], 1
    %727 = vsyncpa [#allocation4], 1

</llo_original>
